<compile_context>
chip_gen: v5e
topology: v5e:2x2
jax: 0.10.0
libtpu: 0.0.40
codegen_flags: <defaults>
</compile_context>

<pallas_src>
import math

import jax
import jax.numpy as jnp
from jax.experimental import pallas as pl
from jax.experimental.pallas import tpu as pltpu


def _round_up(v, m):
    return ((v + m - 1) // m) * m


def _make_gcn_kernel(tk, x_resident):
    """Grid = (adj row tiles [parallel], adj contraction tiles [arbitrary, last])."""

    def kernel(adj_ref, x_ref, wt_ref, out_ref, acc_ref):
        k = pl.program_id(1)

        @pl.when(k == 0)
        def _():
            acc_ref[...] = jnp.zeros_like(acc_ref)

        if x_resident:
            # x_aug lives fully in VMEM; slice the contraction block locally.
            start = pl.multiple_of(k * tk, tk)
            x_blk = x_ref[pl.ds(start, tk), :]
        else:
            x_blk = x_ref[...]

        # acc += adj_tile @ [x | 1]_tile -- native bf16 MXU pass, f32 accumulate.
        acc_ref[...] += jnp.dot(adj_ref[...], x_blk,
                                preferred_element_type=jnp.float32)

        # Finalize once per row tile: (adj @ [x|1]) @ [[W.T],[b]] -> lane-dense store.
        @pl.when(k == pl.num_programs(1) - 1)
        def _():
            out_ref[...] = jnp.dot(
                acc_ref[...], wt_ref[...], preferred_element_type=jnp.float32
            ).astype(out_ref.dtype)

    return kernel


def graph_conv_layer(adj, x, weight, bias_lin):
    """adj: (N, N), x: (N, in), weight: (out, in), bias_lin: (out,) -> (N, out)."""
    n, in_f = x.shape
    out_f = weight.shape[0]

    # ---------------- tile sizing ------------------------------------------
    if n <= 512:
        # Single grid step: pad rows only to the sublane multiple, lanes to 128.
        n_row_pad = _round_up(n, 16)         # bf16 adj sublane pack (also /8 f32)
        n_col_pad = _round_up(n, 128)        # adj lane dim == x row dim
        tm, tk = n_row_pad, n_col_pad        # grid = (1, 1); one TC on v7x (tiny N)
    else:
        tm = 512
        # Prefer an even number of row tiles so both v7x TensorCores are used.
        if (_round_up(n, 512) // 512) % 2 == 1 and (_round_up(n, 256) // 256) % 2 == 0:
            tm = 256
        tk = min(2048, _round_up(n, 512))    # 2 MiB bf16 adj tile at tk=2048
        n_row_pad = _round_up(n, tm)
        n_col_pad = _round_up(n, tk)

    in_pad = _round_up(in_f + 1, 128)        # +1 column carries the folded bias
    out_pad = _round_up(out_f, 128)          # lane-dense output stores

    # Keep x_aug fully VMEM-resident unless it is very large (budget vs 64 MiB v7x).
    x_resident = (2 * n_col_pad * in_pad * 2) <= 16 * 1024 * 1024

    # ---------------- wrapper-side packing (padding sliced off at the end) --
    adj_b = adj if adj.dtype == jnp.bfloat16 else adj.astype(jnp.bfloat16)
    if (n_row_pad, n_col_pad) != (n, n):
        adj_b = jnp.pad(adj_b, ((0, n_row_pad - n), (0, n_col_pad - n)))

    x_aug = jnp.concatenate(
        [x.astype(jnp.bfloat16), jnp.ones((n, 1), jnp.bfloat16)], axis=1
    )
    if (n_col_pad, in_pad) != (n, in_f + 1):
        x_aug = jnp.pad(x_aug, ((0, n_col_pad - n), (0, in_pad - (in_f + 1))))

    wt_aug = jnp.concatenate(
        [weight.T.astype(jnp.float32), bias_lin.astype(jnp.float32)[None, :]], axis=0
    )
    if (in_pad, out_pad) != (in_f + 1, out_f):
        wt_aug = jnp.pad(wt_aug, ((0, in_pad - (in_f + 1)), (0, out_pad - out_f)))

    # ---------------- pallas_call ------------------------------------------
    if x_resident:
        x_spec = pl.BlockSpec((n_col_pad, in_pad), lambda i, k: (0, 0))
    else:
        x_spec = pl.BlockSpec((tk, in_pad), lambda i, k: (k, 0))

    grid = (n_row_pad // tm, n_col_pad // tk)

    out_p = pl.pallas_call(
        _make_gcn_kernel(tk, x_resident),
        out_shape=jax.ShapeDtypeStruct((n_row_pad, out_pad), x.dtype),
        grid=grid,
        in_specs=[
            pl.BlockSpec((tm, tk), lambda i, k: (i, k)),           # adj tile (bf16)
            x_spec,                                                # [x|1] (bf16)
            pl.BlockSpec((in_pad, out_pad), lambda i, k: (0, 0)),  # W/b, resident
        ],
        out_specs=pl.BlockSpec((tm, out_pad), lambda i, k: (i, 0)),
        scratch_shapes=[pltpu.VMEM((tm, in_pad), jnp.float32)],    # f32 accumulator
        compiler_params=pltpu.CompilerParams(
            dimension_semantics=("parallel", "arbitrary"),
            vmem_limit_bytes=48 * 1024 * 1024,
        ),
    )(adj_b, x_aug, wt_aug)

    return out_p[:n, :out_f]


# TODO(synk): `aggregation` (sum/mean/max over dim=1) and `self_loop_w` are
# defined in __init__ but never used in the reference forward(); the extra
# `bias` attribute path is unreachable in the spec. They are intentionally
# omitted from the kernel.


def _init_linear_params(key, in_features, out_features):
    """Deterministic PyTorch-nn.Linear-style init (kaiming-uniform-ish)."""
    kw, kb = jax.random.split(key)
    limit = 1.0 / math.sqrt(in_features)
    weight = jax.random.uniform(
        kw, (out_features, in_features), jnp.float32, -limit, limit
    )
    bias = jax.random.uniform(kb, (out_features,), jnp.float32, -limit, limit)
    return weight, bias


if __name__ == "__main__":
    key = jax.random.PRNGKey(0)
    k_adj, k_x, k_lin = jax.random.split(key, 3)

    N = 16            # number of graph nodes
    IN_FEATURES = 8
    OUT_FEATURES = 32

    # Dense (synthetic) 0/1 adjacency matrix and node features.
    adj = (jax.random.uniform(k_adj, (N, N)) > 0.7).astype(jnp.float32)
    x = jax.random.normal(k_x, (N, IN_FEATURES), dtype=jnp.float32)

    # nn.Linear(in_features, out_features) parameters, deterministic init.
    w_lin, b_lin = _init_linear_params(k_lin, IN_FEATURES, OUT_FEATURES)

    out = graph_conv_layer(adj, x, w_lin, b_lin)
    out = jax.block_until_ready(out)
    assert out.shape == (N, OUT_FEATURES)

    # Reference check in plain JAX (same math as the PyTorch forward).
    # The kernel stores x in bf16 (adj 0/1 and the bias fold stay exact), so
    # compare against a reference with the same x quantization; the remaining
    # difference is only the f32-accumulation rounding of the MXU.
    x_bf = x.astype(jnp.bfloat16).astype(jnp.float32)
    ref_bf = adj @ (x_bf @ w_lin.T + b_lin)
    assert jnp.allclose(out, ref_bf, atol=1e-2, rtol=1e-2), float(
        jnp.max(jnp.abs(out - ref_bf))
    )

    print("KERNEL_OK")
</pallas_src>

<mosaic_0001>
module attributes {stable_mosaic.version = 11 : i64} {
  func.func @kernel(%arg0: i32, %arg1: i32, %arg2: memref<16x128xbf16, #tpu.memory_space<vmem>>, %arg3: memref<128x128xbf16, #tpu.memory_space<vmem>>, %arg4: memref<128x128xf32, #tpu.memory_space<vmem>>, %arg5: memref<16x128xf32, #tpu.memory_space<vmem>>, %arg6: memref<16x128xf32, #tpu.memory_space<vmem>>) attributes {dimension_semantics = [#tpu.dimension_semantics<parallel>, #tpu.dimension_semantics<arbitrary>], iteration_bounds = array<i64: 1, 1>, scalar_prefetch = 0 : i64, scratch_operands = 1 : i64, tpu.core_type = #tpu.core_type<tc>, window_params = [{transform_indices = @transform_0, window_bounds = array<i64: 16, 128>}, {pipeline_mode = #tpu.pipeline_mode<synchronous>, transform_indices = @transform_1, window_bounds = array<i64: 128, 128>}, {pipeline_mode = #tpu.pipeline_mode<synchronous>, transform_indices = @transform_2, window_bounds = array<i64: 128, 128>}, {transform_indices = @transform_3, window_bounds = array<i64: 16, 128>}]} {
    %c0_i32 = arith.constant 0 : i32
    %0 = arith.cmpi eq, %arg1, %c0_i32 : i32
    %1 = arith.extui %0 : i1 to i32
    %c0_i32_0 = arith.constant 0 : i32
    %2 = arith.cmpi ne, %1, %c0_i32_0 : i32
    scf.if %2 {
      %cst_9 = arith.constant 0.000000e+00 : f32
      %15 = vector.broadcast %cst_9 : f32 to vector<16x128xf32>
      %c0_10 = arith.constant 0 : index
      %c0_11 = arith.constant 0 : index
      %16 = vector.load %arg6[%c0_10, %c0_11] : memref<16x128xf32, #tpu.memory_space<vmem>>, vector<16x128xf32>
      tpu.vector_store %arg6[%c0_10, %c0_11], %15 {strides = array<i32>} : memref<16x128xf32, #tpu.memory_space<vmem>>, vector<16x128xf32>,
    } else {
    }
    %c128_i32 = arith.constant 128 : i32
    %3 = arith.muli %arg1, %c128_i32 : i32
    %4 = tpu.assume_multiple %3, 128 : i32
    %5 = arith.index_cast %4 : i32 to index
    %c0 = arith.constant 0 : index
    %6 = vector.load %arg3[%5, %c0] : memref<128x128xbf16, #tpu.memory_space<vmem>>, vector<128x128xbf16>
    %c0_1 = arith.constant 0 : index
    %c0_2 = arith.constant 0 : index
    %7 = vector.load %arg6[%c0_1, %c0_2] : memref<16x128xf32, #tpu.memory_space<vmem>>, vector<16x128xf32>
    %c0_3 = arith.constant 0 : index
    %c0_4 = arith.constant 0 : index
    %8 = vector.load %arg2[%c0_3, %c0_4] : memref<16x128xbf16, #tpu.memory_space<vmem>>, vector<16x128xbf16>
    %cst = arith.constant dense<0.000000e+00> : vector<16x128xf32>
    %9 = tpu.matmul %8, %6, %cst {dimension_numbers = #tpu.dot_dimension_numbers<[1], [0], [0], [1], [0, 0, 1, 1], [], []>} : vector<16x128xbf16>, vector<128x128xbf16>, vector<16x128xf32> -> vector<16x128xf32>
    %10 = arith.addf %7, %9 : vector<16x128xf32>
    %c0_5 = arith.constant 0 : index
    %c0_6 = arith.constant 0 : index
    %11 = vector.load %arg6[%c0_5, %c0_6] : memref<16x128xf32, #tpu.memory_space<vmem>>, vector<16x128xf32>
    tpu.vector_store %arg6[%c0_5, %c0_6], %10 {strides = array<i32>} : memref<16x128xf32, #tpu.memory_space<vmem>>, vector<16x128xf32>,
    %c0_i32_7 = arith.constant 0 : i32
    %12 = arith.cmpi eq, %arg1, %c0_i32_7 : i32
    %13 = arith.extui %12 : i1 to i32
    %c0_i32_8 = arith.constant 0 : i32
    %14 = arith.cmpi ne, %13, %c0_i32_8 : i32
    scf.if %14 {
      %c0_9 = arith.constant 0 : index
      %c0_10 = arith.constant 0 : index
      %15 = vector.load %arg6[%c0_9, %c0_10] : memref<16x128xf32, #tpu.memory_space<vmem>>, vector<16x128xf32>
      %c0_11 = arith.constant 0 : index
      %c0_12 = arith.constant 0 : index
      %16 = vector.load %arg4[%c0_11, %c0_12] : memref<128x128xf32, #tpu.memory_space<vmem>>, vector<128x128xf32>
      %cst_13 = arith.constant dense<0.000000e+00> : vector<16x128xf32>
      %17 = tpu.matmul %15, %16, %cst_13 {dimension_numbers = #tpu.dot_dimension_numbers<[1], [0], [0], [1], [0, 0, 1, 1], [], []>} : vector<16x128xf32>, vector<128x128xf32>, vector<16x128xf32> -> vector<16x128xf32>
      %c0_14 = arith.constant 0 : index
      %c0_15 = arith.constant 0 : index
      %18 = vector.load %arg5[%c0_14, %c0_15] : memref<16x128xf32, #tpu.memory_space<vmem>>, vector<16x128xf32>
      tpu.vector_store %arg5[%c0_14, %c0_15], %17 {strides = array<i32>} : memref<16x128xf32, #tpu.memory_space<vmem>>, vector<16x128xf32>,
    } else {
    }
    return
  }
  func.func @transform_0(%arg0: i32, %arg1: i32) -> (i32, i32) {
    %c0_i32 = arith.constant 0 : i32
    return %arg0, %arg1 : i32, i32
  }
  func.func @transform_1(%arg0: i32, %arg1: i32) -> (i32, i32) {
    %c0_i32 = arith.constant 0 : i32
    %c0_i32_0 = arith.constant 0 : i32
    %c0_i32_1 = arith.constant 0 : i32
    return %c0_i32, %c0_i32_0 : i32, i32
  }
  func.func @transform_2(%arg0: i32, %arg1: i32) -> (i32, i32) {
    %c0_i32 = arith.constant 0 : i32
    %c0_i32_0 = arith.constant 0 : i32
    %c0_i32_1 = arith.constant 0 : i32
    return %c0_i32, %c0_i32_0 : i32, i32
  }
  func.func @transform_3(%arg0: i32, %arg1: i32) -> (i32, i32) {
    %c0_i32 = arith.constant 0 : i32
    %c0_i32_0 = arith.constant 0 : i32
    return %arg0, %c0_i32 : i32, i32
  }
}

</mosaic_0001>

<llo_original>
// kernel: tpu_custom_call.1
$region0: #{tpu_custom_call.1}
  #allocation0 [shape = 'u32[]', space=smem, size = 0x4, offset = 0x4, fixed_abs, tag = 'smem constant byte address 0x4 - core index']
  #allocation1 [shape = 'u32[72,128]{1,0:T(1,128)}', space=vmem, size = 0x9000, scoped, tag = 'internal scratch']
  #allocation2 [shape = 'f32[16,128]{1,0:T(8,128)}', space=vmem, size = 0x2000, scoped, tag = 'scratch operand']
  %s0 = inlined_call_operand.hbm [shape: bf16[16,128], index: 0, kind: input, shape index: {}]
  %s1 = inlined_call_operand.hbm [shape: bf16[128,128], index: 1, kind: input, shape index: {}]
  %s2 = inlined_call_operand.hbm [shape: f32[128,128], index: 2, kind: input, shape index: {}]
  %s3 = inlined_call_operand.hbm [shape: f32[16,128], index: 3, kind: output, shape index: {}]
  %s4 = sld [smem:[#allocation0]]
  $region42: #{tpu_custom_call.1} parent=0
    _
  %s6 = ssub.s32 1, %s4
  %s7 = scalar_select 0, %s6, %s4
  $region1: #{tpu_custom_call.1} parent=0
    #allocation3 [shape = 'u8[4096]{0}', space=vmem, size = 0x1000, scoped, tag = 'input window, operand 0, single buffered']
    #allocation4 [shape = 's32[1]{0}', space=sflag, size = 0x4, scoped, tag = 'scoped memory for tpu_custom_call.1']
    #allocation5 [shape = 's32[1]{0}', space=sflag, size = 0x4, scoped, tag = 'scoped memory for tpu_custom_call.1']
    #allocation6 [shape = 'u8[32768]{0}', space=vmem, size = 0x8000, scoped, tag = 'input window, operand 1, single buffered']
    #allocation7 [shape = 's32[1]{0}', space=sflag, size = 0x4, scoped, tag = 'scoped memory for tpu_custom_call.1']
    #allocation8 [shape = 'u8[65536]{0}', space=vmem, size = 0x10000, scoped, tag = 'input window, operand 2, single buffered']
    #allocation9 [shape = 'u8[8192]{0}', space=vmem, size = 0x2000, scoped, tag = 'output window, operand 0, single buffered']
    %8 = vsyncpa [#allocation4], 0
    %9 = vsyncpa [#allocation7], 0
    %10 = vsyncpa [#allocation5], 0
    // Predicated region
    $region2: #{tpu_custom_call.1} parent=1 // pred_check
      _
    $region3: #{tpu_custom_call.1} parent=1 // pred_check_branch
      %12 = sbr.rel (0) target = $region5
    $region4: #{tpu_custom_call.1} parent=1 // pred_region
      %14 = vsyncadd [#allocation4], 0
      %s15 = sshll.u32 %s0, 4
      %s16 = int_to_ptr.hbm [resolvable:$true] %s15
      %s17 = sshll.u32 [#allocation3], 4
      %s18 = int_to_ptr.vmem [resolvable:$true] %s17
      %23 = dma.hbm_to_vmem [thread:$0]  %s16, 128, %s18, [#allocation4], 64, 64, 4
    $region5: #{tpu_custom_call.1} parent=1 // pred_fallthru
      _
    // Predicated region
    $region6: #{tpu_custom_call.1} parent=1 // pred_check
      _
    $region7: #{tpu_custom_call.1} parent=1 // pred_check_branch
      %25 = sbr.rel (0) target = $region9
    $region8: #{tpu_custom_call.1} parent=1 // pred_region
      %27 = vsyncadd [#allocation7], 0
      %s28 = sshll.u32 %s1, 4
      %s29 = int_to_ptr.hbm [resolvable:$true] %s28
      %s30 = sshll.u32 [#allocation6], 4
      %s31 = int_to_ptr.vmem [resolvable:$true] %s30
      %36 = dma.hbm_to_vmem [thread:$0]  %s29, 1024, %s31, [#allocation7], 64, 64, 4
    $region9: #{tpu_custom_call.1} parent=1 // pred_fallthru
      _
    // Predicated region
    $region10: #{tpu_custom_call.1} parent=1 // pred_check
      _
    $region11: #{tpu_custom_call.1} parent=1 // pred_check_branch
      %38 = sbr.rel (0) target = $region13
    $region12: #{tpu_custom_call.1} parent=1 // pred_region
      %40 = vsyncadd [#allocation7], 0
      %s41 = sshll.u32 %s2, 4
      %s42 = int_to_ptr.hbm [resolvable:$true] %s41
      %s43 = sshll.u32 [#allocation8], 4
      %s44 = int_to_ptr.vmem [resolvable:$true] %s43
      %49 = dma.hbm_to_vmem [thread:$0]  %s42, 2048, %s44, [#allocation7], 128, 128, 8
    $region13: #{tpu_custom_call.1} parent=1 // pred_fallthru
      _
    // Predicated region
    $region14: #{tpu_custom_call.1} parent=1 // pred_check
      _
    $region15: #{tpu_custom_call.1} parent=1 // pred_check_branch
      %51 = sbr.rel (0) target = $region17
    $region16: #{tpu_custom_call.1} parent=1 // pred_region
      %53 = dma.done [#allocation4], 128
    $region17: #{tpu_custom_call.1} parent=1 // pred_fallthru
      _
    // Predicated region
    $region18: #{tpu_custom_call.1} parent=1 // pred_check
      _
    $region19: #{tpu_custom_call.1} parent=1 // pred_check_branch
      %55 = sbr.rel (0) target = $region21
    $region20: #{tpu_custom_call.1} parent=1 // pred_region
      %57 = dma.done [#allocation7], 1024
    $region21: #{tpu_custom_call.1} parent=1 // pred_fallthru
      _
    // Predicated region
    $region22: #{tpu_custom_call.1} parent=1 // pred_check
      _
    $region23: #{tpu_custom_call.1} parent=1 // pred_check_branch
      %59 = sbr.rel (0) target = $region25
    $region24: #{tpu_custom_call.1} parent=1 // pred_region
      %61 = dma.done [#allocation7], 2048
    $region25: #{tpu_custom_call.1} parent=1 // pred_fallthru
      _
    %p62 = scmp.eq.s32.totalorder 0, 0
    // Predicated region
    $region26: #{tpu_custom_call.1} parent=1 // pred_check
      %p63 = pneg %p62
    $region27: #{tpu_custom_call.1} parent=1 // pred_check_branch
      %65 = sbr.rel (%p63) target = $region29
    $region28: #{tpu_custom_call.1} parent=1 // pred_region
      %66 = vst [vmem:[#allocation2] sm:$0xff] 0.0
      %67 = vst [vmem:[#allocation2 + $0x8] sm:$0xff] 0.0
    $region29: #{tpu_custom_call.1} parent=1 // pred_fallthru
      _
    %s68 = smul.u32 0, 128
    %s69 = sshra.s32 %s68, 3
    %s70 = sand.u32 %s68, 7
    %s71 = smul.addr %s69, 4
    %s72 = scalar_lea.vmem [#allocation6], %s71
    %v73 = vld [vmem:[%s72] sm:$0xf]
    %v74 = vld [vmem:[%s72 + $0x4] sm:$0xf]
    %v75 = vld [vmem:[%s72 + $0x8] sm:$0xf]
    %v76 = vld [vmem:[%s72 + $0xc] sm:$0xf]
    %v77 = vld [vmem:[%s72 + $0x10] sm:$0xf]
    %v78 = vld [vmem:[%s72 + $0x14] sm:$0xf]
    %v79 = vld [vmem:[%s72 + $0x18] sm:$0xf]
    %v80 = vld [vmem:[%s72 + $0x1c] sm:$0xf]
    %v81 = vld [vmem:[%s72 + $0x20] sm:$0xf]
    %v82 = vld [vmem:[%s72 + $0x24] sm:$0xf]
    %v83 = vld [vmem:[%s72 + $0x28] sm:$0xf]
    %v84 = vld [vmem:[%s72 + $0x2c] sm:$0xf]
    %v85 = vld [vmem:[%s72 + $0x30] sm:$0xf]
    %v86 = vld [vmem:[%s72 + $0x34] sm:$0xf]
    %v87 = vld [vmem:[%s72 + $0x38] sm:$0xf]
    %v88 = vld [vmem:[%s72 + $0x3c] sm:$0xf]
    %v89 = vld [vmem:[#allocation2] sm:$0xff]
    %v90 = vld [vmem:[#allocation2 + $0x8] sm:$0xff]
    %v91 = vld [vmem:[#allocation3] sm:$0xf]
    %v92 = vld [vmem:[#allocation3 + $0x4] sm:$0xf]
    %v95 = vunpack.c.l.b16 %v91
    %v96 = vunpack.c.l.b16 %v92
    %v97 = vpack.c.b16 %v96, %v95
    %v115 = vunpack.c.l.b16 %v73
    %v116 = vunpack.c.l.b16 %v74
    %v117 = vunpack.c.l.b16 %v75
    %v118 = vunpack.c.l.b16 %v76
    %v119 = vunpack.c.l.b16 %v77
    %v120 = vunpack.c.l.b16 %v78
    %v121 = vunpack.c.l.b16 %v79
    %v122 = vunpack.c.l.b16 %v80
    %v123 = vunpack.c.l.b16 %v81
    %v124 = vunpack.c.l.b16 %v82
    %v125 = vunpack.c.l.b16 %v83
    %v126 = vunpack.c.l.b16 %v84
    %v127 = vunpack.c.l.b16 %v85
    %v128 = vunpack.c.l.b16 %v86
    %v129 = vunpack.c.l.b16 %v87
    %v130 = vunpack.c.l.b16 %v88
    %v131 = vpack.c.b16 %v116, %v115
    %v132 = vpack.c.b16 %v118, %v117
    %v133 = vpack.c.b16 %v120, %v119
    %v134 = vpack.c.b16 %v122, %v121
    %v135 = vpack.c.b16 %v124, %v123
    %v136 = vpack.c.b16 %v126, %v125
    %v137 = vpack.c.b16 %v128, %v127
    %v138 = vpack.c.b16 %v130, %v129
    %147 = vmatpush.bf16.msra.mxu0 %v138
    %148 = vmatpush.bf16.msra.mxu0 %v137
    %149 = vmatpush.bf16.msra.mxu0 %v136
    %150 = vmatpush.bf16.msra.mxu0 %v135
    %151 = vmatpush.bf16.msra.mxu0 %v134
    %152 = vmatpush.bf16.msra.mxu0 %v133
    %153 = vmatpush.bf16.msra.mxu0 %v132
    %154 = vmatpush.bf16.msra.mxu0 %v131
    %155 = vmatmul.bf16.gmra.mxu0 %v97
    %v156 = vpop.f32.mrf.mxu0
    %v157 = vadd.f32 0.0, %v156
    %v158 = vpop.f32.mrf.mxu0
    %v159 = vadd.f32 0.0, %v158
    %160 = vdwg.mxu0
    %v161 = vadd.f32 %v89, %v157
    %v162 = vadd.f32 %v90, %v159
    %163 = vst [vmem:[#allocation2] sm:$0xff] %v161
    %164 = vst [vmem:[#allocation2 + $0x8] sm:$0xff] %v162
    // Predicated region
    $region30: #{tpu_custom_call.1} parent=1 // pred_check
      %p165 = pneg %p62
    $region31: #{tpu_custom_call.1} parent=1 // pred_check_branch
      %167 = sbr.rel (%p165) target = $region33
    $region32: #{tpu_custom_call.1} parent=1 // pred_region
      %v168 = vld [vmem:[#allocation2] sm:$0xff]
      %v169 = vld [vmem:[#allocation2 + $0x8] sm:$0xff]
      %v170 = vld [vmem:[#allocation8] sm:$0xff]
      %v171 = vld [vmem:[#allocation8 + $0x8] sm:$0xff]
      %v172 = vld [vmem:[#allocation8 + $0x10] sm:$0xff]
      %v173 = vld [vmem:[#allocation8 + $0x18] sm:$0xff]
      %v174 = vld [vmem:[#allocation8 + $0x20] sm:$0xff]
      %v175 = vld [vmem:[#allocation8 + $0x28] sm:$0xff]
      %v176 = vld [vmem:[#allocation8 + $0x30] sm:$0xff]
      %v177 = vld [vmem:[#allocation8 + $0x38] sm:$0xff]
      %v178 = vld [vmem:[#allocation8 + $0x40] sm:$0xff]
      %v179 = vld [vmem:[#allocation8 + $0x48] sm:$0xff]
      %v180 = vld [vmem:[#allocation8 + $0x50] sm:$0xff]
      %v181 = vld [vmem:[#allocation8 + $0x58] sm:$0xff]
      %v182 = vld [vmem:[#allocation8 + $0x60] sm:$0xff]
      %v183 = vld [vmem:[#allocation8 + $0x68] sm:$0xff]
      %v184 = vld [vmem:[#allocation8 + $0x70] sm:$0xff]
      %v185 = vld [vmem:[#allocation8 + $0x78] sm:$0xff]
      %186 = vmatpush.msra.mxu0 %v185
      %187 = vmatpush.msra.mxu0 %v184
      %188 = vmatpush.msra.mxu0 %v183
      %189 = vmatpush.msra.mxu0 %v182
      %190 = vmatpush.msra.mxu0 %v181
      %191 = vmatpush.msra.mxu0 %v180
      %192 = vmatpush.msra.mxu0 %v179
      %193 = vmatpush.msra.mxu0 %v178
      %194 = vmatpush.msra.mxu0 %v177
      %195 = vmatpush.msra.mxu0 %v176
      %196 = vmatpush.msra.mxu0 %v175
      %197 = vmatpush.msra.mxu0 %v174
      %198 = vmatpush.msra.mxu0 %v173
      %199 = vmatpush.msra.mxu0 %v172
      %200 = vmatpush.msra.mxu0 %v171
      %201 = vmatpush.msra.mxu0 %v170
      %202 = vmatmul.f32.gmra.mxu0 %v168
      %v203 = vpop.f32.mrf.mxu0
      %v204 = vadd.f32 0.0, %v203
      %205 = vmatmul.f32.gmra.mxu0 %v169
      %v206 = vpop.f32.mrf.mxu0
      %v207 = vadd.f32 0.0, %v206
      %208 = vdwg.mxu0
      %209 = vst [vmem:[#allocation9] sm:$0xff] %v204
      %210 = vst [vmem:[#allocation9 + $0x8] sm:$0xff] %v207
    $region33: #{tpu_custom_call.1} parent=1 // pred_fallthru
      _
    // Predicated region
    $region34: #{tpu_custom_call.1} parent=1 // pred_check
      _
    $region35: #{tpu_custom_call.1} parent=1 // pred_check_branch
      %212 = sbr.rel (0) target = $region37
    $region36: #{tpu_custom_call.1} parent=1 // pred_region
      %214 = vsyncadd [#allocation5], 0
      %s215 = sshll.u32 [#allocation9], 4
      %s216 = int_to_ptr.vmem [resolvable:$true] %s215
      %s217 = sshll.u32 %s3, 4
      %s218 = int_to_ptr.hbm [resolvable:$true] %s217
      %223 = dma.vmem_to_hbm [thread:$0]  %s216, 256, %s218, [#allocation5], 128, 128, 8
    $region37: #{tpu_custom_call.1} parent=1 // pred_fallthru
      _
    // Predicated region
    $region38: #{tpu_custom_call.1} parent=1 // pred_check
      _
    $region39: #{tpu_custom_call.1} parent=1 // pred_check_branch
      %225 = sbr.rel (0) target = $region41
    $region40: #{tpu_custom_call.1} parent=1 // pred_region
      %227 = dma.done [#allocation5], 256
    $region41: #{tpu_custom_call.1} parent=1 // pred_fallthru
      _
    %228 = vsyncpa [#allocation4], 1
    %229 = vsyncpa [#allocation7], 1
    %230 = vsyncpa [#allocation5], 1

</llo_original>
